<compile_context>
chip_gen: v6e
topology: v6e:2x2x1
jax: 0.10.0
libtpu: 0.0.40
codegen_flags: <defaults>
</compile_context>

<pallas_src>
import functools

import jax
import jax.numpy as jnp
from jax import lax
from jax.experimental import pallas as pl
from jax.experimental.pallas import tpu as pltpu

_ERF_SCALE = 1.0 / 1.41421  # torch module uses the literal 1.41421 (not sqrt(2))
_MiB = 1024 * 1024


def _bias_gelu_linear_kernel(x_ref, wt_ref, b_ref, o_ref):
    """One (tm, tn) output tile: full-K matmul + bias + erf-GELU, all fused."""
    y = jnp.dot(x_ref[...], wt_ref[...], preferred_element_type=jnp.float32)
    y = y + b_ref[...].astype(jnp.float32)          # bias_gelu: float32 path
    g = y * 0.5 * (1.0 + lax.erf(y * _ERF_SCALE))
    o_ref[...] = g.astype(o_ref.dtype)


def _round_up(x, m):
    return ((x + m - 1) // m) * m


def _chip_limits():
    """Per-generation (block+temp budget, tm_max, vmem_limit_bytes)."""
    kind = ""
    try:
        kind = jax.devices()[0].device_kind.lower()
    except Exception:
        pass
    if "v5 lite" in kind or "v5e" in kind or "v5lite" in kind:
        # v5e: MXU-bound at bf16; modest tiles cost little. 128 MiB physical VMEM.
        return 24 * _MiB, 256, 48 * _MiB
    if "v6" in kind:
        # v6e: 128 MiB physical VMEM; bigger tiles amortize per-grid-step overhead.
        return 80 * _MiB, 512, 100 * _MiB
    if "7" in kind:
        # v7x: 64 MiB physical / TC (32 MiB scoped default); both TCs duplicate
        # the resident weight tile, so keep blocks + f32 temps under ~24 MiB.
        return 24 * _MiB, 512, 30 * _MiB
    # Unknown (v4/v5p/...): conservative.
    return 20 * _MiB, 256, 32 * _MiB


def _choose_tiles(M, H, I_pad, itemsize, budget, tm_max):
    """Pick (tm, tn) so blocks + f32 epilogue temps + scratch fit the budget."""
    tn = I_pad  # prefer the whole (padded) intermediate axis resident in VMEM

    def w_bytes(tn_):
        return H * tn_ * itemsize

    # Shrink tn only if the single-buffered weight tile itself cannot fit.
    while tn > 256 and w_bytes(tn) > 0.6 * budget:
        tn = max(256, _round_up((tn + 1) // 2, 256))

    tm = min(tm_max, _round_up(M, 8))

    def footprint(tm_, tn_):
        blocks = (2 * tm_ * H          # x panel (double-buffered)
                  + 1 * H * tn_        # weight tile (single-buffered)
                  + 8 * tn_            # bias tile (sublane-padded)
                  + 2 * tm_ * tn_      # output tile (double-buffered)
                  ) * itemsize
        f32_temps = 2 * tm_ * tn_ * 4  # MXU f32 result + erf temporaries
        scratch = 1 * _MiB             # Mosaic internal scratch headroom
        return blocks + f32_temps + scratch

    # Shrink tm first: only adds grid steps, keeps x streamed exactly once.
    while tm > 64 and footprint(tm, tn) > budget:
        tm = max(64, _round_up(tm // 2, 8))
    # Only if tm has bottomed out, shrink tn (re-streams the activations).
    while tn > 256 and footprint(tm, tn) > budget:
        tn = max(256, _round_up((tn + 1) // 2, 256))
    return tm, tn


def _bspec(shape, index_map, pipeline_mode=None):
    if pipeline_mode is None:
        return pl.BlockSpec(shape, index_map)
    return pl.BlockSpec(shape, index_map, pipeline_mode=pipeline_mode)


@functools.partial(jax.jit, static_argnames=("out_features", "single_buffer"))
def _bert_intermediate_apply(hidden_states, w_t, b2d, out_features,
                             single_buffer=True):
    """hidden_states: (B, S, H); w_t: (H, I_pad) prepared weight; b2d: (1, I_pad)."""
    B, S, H = hidden_states.shape
    H2, I_pad = w_t.shape
    assert H2 == H, "prepared weight must be (hidden_size, padded_intermediate)"
    M = B * S
    out_dtype = hidden_states.dtype
    itemsize = jnp.dtype(w_t.dtype).itemsize

    budget, tm_max, vmem_limit = _chip_limits()
    tm, tn = _choose_tiles(M, H, I_pad, itemsize, budget, tm_max)

    x2d = hidden_states.reshape(M, H)
    if x2d.dtype != w_t.dtype:
        x2d = x2d.astype(w_t.dtype)  # only on opt-in low-precision matmul

    m_tiles = pl.cdiv(M, tm)
    n_tiles = pl.cdiv(I_pad, tn)

    cost = pl.CostEstimate(
        flops=2 * M * H * I_pad,
        transcendentals=M * I_pad,
        bytes_accessed=(M * H + H * I_pad + I_pad + M * I_pad) * itemsize,
    )
    pipeline_mode = pl.Buffered(1) if single_buffer else None

    if n_tiles == 1:
        # Weight fully resident: 1-D grid over M so dual-TC sharding hits M.
        grid = (m_tiles,)
        in_specs = [
            _bspec((tm, H), lambda i: (i, 0)),
            _bspec((H, tn), lambda i: (0, 0), pipeline_mode),
            _bspec((1, tn), lambda i: (0, 0), pipeline_mode),
        ]
        out_specs = pl.BlockSpec((tm, tn), lambda i: (i, 0))
        dim_sem = ("parallel",)
    else:
        # M innermost: the weight/bias block index is constant across the inner
        # axis, so each (H, tn) weight tile is DMA'd once per N tile.
        grid = (n_tiles, m_tiles)
        in_specs = [
            _bspec((tm, H), lambda j, i: (i, 0)),
            _bspec((H, tn), lambda j, i: (0, j), pipeline_mode),
            _bspec((1, tn), lambda j, i: (0, j), pipeline_mode),
        ]
        out_specs = pl.BlockSpec((tm, tn), lambda j, i: (i, j))
        dim_sem = ("parallel", "parallel")

    out2d = pl.pallas_call(
        _bias_gelu_linear_kernel,
        out_shape=jax.ShapeDtypeStruct((M, I_pad), out_dtype),
        grid_spec=pltpu.PrefetchScalarGridSpec(
            num_scalar_prefetch=0,
            grid=grid,
            in_specs=in_specs,
            out_specs=out_specs,
        ),
        compiler_params=pltpu.CompilerParams(
            dimension_semantics=dim_sem,
            vmem_limit_bytes=vmem_limit,
        ),
        cost_estimate=cost,
    )(x2d, w_t, b2d)

    if I_pad != out_features:
        out2d = out2d[:, :out_features]
    return out2d.reshape(B, S, out_features)


def make_bert_intermediate(weight, bias, dtype=None):
    """Prepare (transpose / cast / pad) the parameters once; return apply fn.

    weight: (intermediate_size, hidden_size) — torch nn.Linear layout.
    bias:   (intermediate_size,)
    dtype:  optional matmul dtype (e.g. jnp.bfloat16) — opt-in, changes numerics.
    """
    I, H = weight.shape
    w_dtype = jnp.dtype(dtype) if dtype is not None else jnp.asarray(weight).dtype
    I_pad = _round_up(I, 128)

    # One-time HBM pass, hoisted out of the per-token path.
    w_t = jnp.asarray(weight).T.astype(w_dtype)        # (H, I): lane-dense N axis
    b2d = jnp.asarray(bias).reshape(1, I)
    if I_pad != I:
        w_t = jnp.pad(w_t, ((0, 0), (0, I_pad - I)))
        b2d = jnp.pad(b2d, ((0, 0), (0, I_pad - I)))

    state = {"single_buffer": True}

    def fn(hidden_states):
        if state["single_buffer"]:
            try:
                return _bert_intermediate_apply(
                    hidden_states, w_t, b2d, int(I), single_buffer=True)
            except Exception:
                # Fallback for JAX versions without BlockSpec pipeline_mode.
                state["single_buffer"] = False
        return _bert_intermediate_apply(
            hidden_states, w_t, b2d, int(I), single_buffer=False)

    return fn


def bert_intermediate(hidden_states, weight, bias, dtype=None):
    """One-shot convenience wrapper (prep is re-done per call; prefer make_*)."""
    return make_bert_intermediate(weight, bias, dtype=dtype)(hidden_states)


def _reference(hidden_states, weight, bias):
    y = jnp.einsum("bsh,ih->bsi", hidden_states, weight)
    x = y.astype(jnp.float32) + bias.astype(jnp.float32)
    g = x * 0.5 * (1.0 + lax.erf(x / 1.41421))
    return g.astype(hidden_states.dtype)


if __name__ == "__main__":
    # Small config consistent with BertIntermediate:
    #   hidden_size = 128, intermediate_size = 512, batch = 2, seq = 8
    B, S, H, I = 2, 8, 128, 512

    key = jax.random.PRNGKey(0)
    k_x, k_w, k_b = jax.random.split(key, 3)

    hidden_states = jax.random.normal(k_x, (B, S, H), dtype=jnp.float32)
    # Deterministic synthetic parameters (shapes from nn.Linear(H, I)):
    weight = jax.random.normal(k_w, (I, H), dtype=jnp.float32) * (1.0 / jnp.sqrt(H))
    bias = jax.random.normal(k_b, (I,), dtype=jnp.float32) * 0.02

    layer = make_bert_intermediate(weight, bias)   # parameter prep hoisted
    out = jax.block_until_ready(layer(hidden_states))

    ref = _reference(hidden_states, weight, bias)
    assert out.shape == (B, S, I)
    assert jnp.allclose(out, ref, atol=1e-4, rtol=1e-4)

    print("KERNEL_OK")
</pallas_src>

<mosaic_0001>
module attributes {stable_mosaic.version = 11 : i64} {
  func.func @_bias_gelu_linear_kernel(%arg0: i32, %arg1: memref<16x128xf32, #tpu.memory_space<vmem>>, %arg2: memref<128x512xf32, #tpu.memory_space<vmem>>, %arg3: memref<1x512xf32, #tpu.memory_space<vmem>>, %arg4: memref<16x512xf32, #tpu.memory_space<vmem>>) attributes {dimension_semantics = [#tpu.dimension_semantics<parallel>], iteration_bounds = array<i64: 1>, scalar_prefetch = 0 : i64, scratch_operands = 0 : i64, tpu.core_type = #tpu.core_type<tc>, window_params = [{transform_indices = @transform_0, window_bounds = array<i64: 16, 128>}, {pipeline_mode = #tpu.pipeline_mode<synchronous>, transform_indices = @transform_1, window_bounds = array<i64: 128, 512>}, {pipeline_mode = #tpu.pipeline_mode<synchronous>, transform_indices = @transform_2, window_bounds = array<i64: 1, 512>}, {transform_indices = @transform_3, window_bounds = array<i64: 16, 512>}]} {
    %c0 = arith.constant 0 : index
    %c0_0 = arith.constant 0 : index
    %0 = vector.load %arg1[%c0, %c0_0] : memref<16x128xf32, #tpu.memory_space<vmem>>, vector<16x128xf32>
    %c0_1 = arith.constant 0 : index
    %c0_2 = arith.constant 0 : index
    %1 = vector.load %arg2[%c0_1, %c0_2] : memref<128x512xf32, #tpu.memory_space<vmem>>, vector<128x512xf32>
    %cst = arith.constant dense<0.000000e+00> : vector<16x512xf32>
    %2 = tpu.matmul %0, %1, %cst {dimension_numbers = #tpu.dot_dimension_numbers<[1], [0], [0], [1], [0, 0, 1, 1], [], []>} : vector<16x128xf32>, vector<128x512xf32>, vector<16x512xf32> -> vector<16x512xf32>
    %c0_3 = arith.constant 0 : index
    %c0_4 = arith.constant 0 : index
    %3 = vector.load %arg3[%c0_3, %c0_4] : memref<1x512xf32, #tpu.memory_space<vmem>>, vector<1x512xf32>
    %4 = vector.broadcast %3 : vector<1x512xf32> to vector<16x512xf32>
    %5 = arith.addf %2, %4 : vector<16x512xf32>
    %cst_5 = arith.constant 5.000000e-01 : f32
    %6 = vector.broadcast %cst_5 : f32 to vector<16x512xf32>
    %7 = arith.mulf %5, %6 : vector<16x512xf32>
    %cst_6 = arith.constant 0.707108557 : f32
    %8 = vector.broadcast %cst_6 : f32 to vector<16x512xf32>
    %9 = arith.mulf %5, %8 : vector<16x512xf32>
    %10 = math.erf %9 : vector<16x512xf32>
    %cst_7 = arith.constant 1.000000e+00 : f32
    %11 = vector.broadcast %cst_7 : f32 to vector<16x512xf32>
    %12 = arith.addf %11, %10 : vector<16x512xf32>
    %13 = arith.mulf %7, %12 : vector<16x512xf32>
    %c0_8 = arith.constant 0 : index
    %c0_9 = arith.constant 0 : index
    %14 = vector.load %arg4[%c0_8, %c0_9] : memref<16x512xf32, #tpu.memory_space<vmem>>, vector<16x512xf32>
    tpu.vector_store %arg4[%c0_8, %c0_9], %13 {strides = array<i32>} : memref<16x512xf32, #tpu.memory_space<vmem>>, vector<16x512xf32>,
    return
  }
  func.func @transform_0(%arg0: i32) -> (i32, i32) {
    %c0_i32 = arith.constant 0 : i32
    %c0_i32_0 = arith.constant 0 : i32
    return %arg0, %c0_i32 : i32, i32
  }
  func.func @transform_1(%arg0: i32) -> (i32, i32) {
    %c0_i32 = arith.constant 0 : i32
    %c0_i32_0 = arith.constant 0 : i32
    %c0_i32_1 = arith.constant 0 : i32
    return %c0_i32, %c0_i32_0 : i32, i32
  }
  func.func @transform_2(%arg0: i32) -> (i32, i32) {
    %c0_i32 = arith.constant 0 : i32
    %c0_i32_0 = arith.constant 0 : i32
    %c0_i32_1 = arith.constant 0 : i32
    return %c0_i32, %c0_i32_0 : i32, i32
  }
  func.func @transform_3(%arg0: i32) -> (i32, i32) {
    %c0_i32 = arith.constant 0 : i32
    %c0_i32_0 = arith.constant 0 : i32
    return %arg0, %c0_i32 : i32, i32
  }
}

module attributes {stable_mosaic.version = 11 : i64} {
  func.func @_bias_gelu_linear_kernel(%arg0: i32, %arg1: memref<16x128xf32, #tpu.memory_space<vmem>>, %arg2: memref<128x512xf32, #tpu.memory_space<vmem>>, %arg3: memref<1x512xf32, #tpu.memory_space<vmem>>, %arg4: memref<16x512xf32, #tpu.memory_space<vmem>>) attributes {dimension_semantics = [#tpu.dimension_semantics<parallel>], iteration_bounds = array<i64: 1>, scalar_prefetch = 0 : i64, scratch_operands = 0 : i64, tpu.core_type = #tpu.core_type<tc>, window_params = [{transform_indices = @transform_0, window_bounds = array<i64: 16, 128>}, {pipeline_mode = #tpu.pipeline_mode<synchronous>, transform_indices = @transform_1, window_bounds = array<i64: 128, 512>}, {pipeline_mode = #tpu.pipeline_mode<synchronous>, transform_indices = @transform_2, window_bounds = array<i64: 1, 512>}, {transform_indices = @transform_3, window_bounds = array<i64: 16, 512>}]} {
    %c0 = arith.constant 0 : index
    %c0_0 = arith.constant 0 : index
    %0 = vector.load %arg1[%c0, %c0_0] : memref<16x128xf32, #tpu.memory_space<vmem>>, vector<16x128xf32>
    %c0_1 = arith.constant 0 : index
    %c0_2 = arith.constant 0 : index
    %1 = vector.load %arg2[%c0_1, %c0_2] : memref<128x512xf32, #tpu.memory_space<vmem>>, vector<128x512xf32>
    %cst = arith.constant dense<0.000000e+00> : vector<16x512xf32>
    %2 = tpu.matmul %0, %1, %cst {dimension_numbers = #tpu.dot_dimension_numbers<[1], [0], [0], [1], [0, 0, 1, 1], [], []>} : vector<16x128xf32>, vector<128x512xf32>, vector<16x512xf32> -> vector<16x512xf32>
    %c0_3 = arith.constant 0 : index
    %c0_4 = arith.constant 0 : index
    %3 = vector.load %arg3[%c0_3, %c0_4] : memref<1x512xf32, #tpu.memory_space<vmem>>, vector<1x512xf32>
    %4 = vector.broadcast %3 : vector<1x512xf32> to vector<16x512xf32>
    %5 = arith.addf %2, %4 : vector<16x512xf32>
    %cst_5 = arith.constant 5.000000e-01 : f32
    %6 = vector.broadcast %cst_5 : f32 to vector<16x512xf32>
    %7 = arith.mulf %5, %6 : vector<16x512xf32>
    %cst_6 = arith.constant 0.707108557 : f32
    %8 = vector.broadcast %cst_6 : f32 to vector<16x512xf32>
    %9 = arith.mulf %5, %8 : vector<16x512xf32>
    %10 = math.erf %9 : vector<16x512xf32>
    %cst_7 = arith.constant 1.000000e+00 : f32
    %11 = vector.broadcast %cst_7 : f32 to vector<16x512xf32>
    %12 = arith.addf %11, %10 : vector<16x512xf32>
    %13 = arith.mulf %7, %12 : vector<16x512xf32>
    %c0_8 = arith.constant 0 : index
    %c0_9 = arith.constant 0 : index
    %14 = vector.load %arg4[%c0_8, %c0_9] : memref<16x512xf32, #tpu.memory_space<vmem>>, vector<16x512xf32>
    tpu.vector_store %arg4[%c0_8, %c0_9], %13 {strides = array<i32>} : memref<16x512xf32, #tpu.memory_space<vmem>>, vector<16x512xf32>,
    return
  }
  func.func @transform_0(%arg0: i32) -> (i32, i32) {
    %c0_i32 = arith.constant 0 : i32
    %c0_i32_0 = arith.constant 0 : i32
    return %arg0, %c0_i32 : i32, i32
  }
  func.func @transform_1(%arg0: i32) -> (i32, i32) {
    %c0_i32 = arith.constant 0 : i32
    %c0_i32_0 = arith.constant 0 : i32
    %c0_i32_1 = arith.constant 0 : i32
    return %c0_i32, %c0_i32_0 : i32, i32
  }
  func.func @transform_2(%arg0: i32) -> (i32, i32) {
    %c0_i32 = arith.constant 0 : i32
    %c0_i32_0 = arith.constant 0 : i32
    %c0_i32_1 = arith.constant 0 : i32
    return %c0_i32, %c0_i32_0 : i32, i32
  }
  func.func @transform_3(%arg0: i32) -> (i32, i32) {
    %c0_i32 = arith.constant 0 : i32
    %c0_i32_0 = arith.constant 0 : i32
    return %arg0, %c0_i32 : i32, i32
  }
}

</mosaic_0001>

<llo_original>
// kernel: _bert_intermediate_apply.1
$region0: #{_bert_intermediate_apply.1}
  #allocation0 [shape = 'u32[]', space=smem, size = 0x4, offset = 0x4, fixed_abs, tag = 'smem constant byte address 0x4 - core index']
  #allocation1 [shape = 'u32[144,128]{1,0:T(1,128)}', space=vmem, size = 0x12000, scoped, tag = 'internal scratch']
  %s0 = inlined_call_operand.hbm [shape: f32[16,128], index: 0, kind: input, shape index: {}]
  %s1 = inlined_call_operand.hbm [shape: f32[128,512], index: 1, kind: input, shape index: {}]
  %s2 = inlined_call_operand.vmem [shape: f32[1,512], index: 2, kind: input, shape index: {}]
  %s3 = inlined_call_operand.hbm [shape: f32[16,512], index: 3, kind: output, shape index: {}]
  %s4 = sld [smem:[#allocation0]]
  $region30: #{_bert_intermediate_apply.1} parent=0
    _
  %s6 = ssub.s32 1, %s4
  %s7 = scalar_select 0, %s6, %s4
  $region1: #{_bert_intermediate_apply.1} parent=0
    #allocation2 [shape = 'u8[8192]{0}', space=vmem, size = 0x2000, scoped, tag = 'input window, operand 0, single buffered']
    #allocation3 [shape = 's32[1]{0}', space=sflag, size = 0x4, scoped, tag = 'scoped memory for _bert_intermediate_apply.1']
    #allocation4 [shape = 's32[1]{0}', space=sflag, size = 0x4, scoped, tag = 'scoped memory for _bert_intermediate_apply.1']
    #allocation5 [shape = 'u8[262144]{0}', space=vmem, size = 0x40000, scoped, tag = 'input window, operand 1, single buffered']
    #allocation6 [shape = 's32[1]{0}', space=sflag, size = 0x4, scoped, tag = 'scoped memory for _bert_intermediate_apply.1']
    #allocation7 [shape = 'u8[32768]{0}', space=vmem, size = 0x8000, scoped, tag = 'output window, operand 0, single buffered']
    %8 = vsyncpa [#allocation3], 0
    %9 = vsyncpa [#allocation6], 0
    %10 = vsyncpa [#allocation4], 0
    // Predicated region
    $region2: #{_bert_intermediate_apply.1} parent=1 // pred_check
      _
    $region3: #{_bert_intermediate_apply.1} parent=1 // pred_check_branch
      %12 = sbr.rel (0) target = $region5
    $region4: #{_bert_intermediate_apply.1} parent=1 // pred_region
      %s14 = ssub.s32 256, 256
      %15 = vsyncadd [#allocation3], %s14
      %s16 = sshll.u32 [#allocation2], 4
      %s17 = int_to_ptr.vmem [resolvable:$true] %s16
      %22 = dma.hbm_to_vmem [thread:$0]  %s0, 256, %s17, [#allocation3], 128, 128, 8
    $region5: #{_bert_intermediate_apply.1} parent=1 // pred_fallthru
      _
    // Predicated region
    $region6: #{_bert_intermediate_apply.1} parent=1 // pred_check
      _
    $region7: #{_bert_intermediate_apply.1} parent=1 // pred_check_branch
      %24 = sbr.rel (0) target = $region9
    $region8: #{_bert_intermediate_apply.1} parent=1 // pred_region
      %s26 = ssub.s32 8192, 8192
      %27 = vsyncadd [#allocation6], %s26
      %s28 = sshll.u32 [#allocation5], 4
      %s29 = int_to_ptr.vmem [resolvable:$true] %s28
      %34 = dma.hbm_to_vmem [thread:$0]  %s1, 8192, %s29, [#allocation6], 512, 512, 32
    $region9: #{_bert_intermediate_apply.1} parent=1 // pred_fallthru
      _
    // Predicated region
    $region10: #{_bert_intermediate_apply.1} parent=1 // pred_check
      _
    $region11: #{_bert_intermediate_apply.1} parent=1 // pred_check_branch
      %36 = sbr.rel (0) target = $region13
    $region12: #{_bert_intermediate_apply.1} parent=1 // pred_region
      _
    $region13: #{_bert_intermediate_apply.1} parent=1 // pred_fallthru
      _
    // Predicated region
    $region14: #{_bert_intermediate_apply.1} parent=1 // pred_check
      _
    $region15: #{_bert_intermediate_apply.1} parent=1 // pred_check_branch
      %38 = sbr.rel (0) target = $region17
    $region16: #{_bert_intermediate_apply.1} parent=1 // pred_region
      %39 = dma.done [#allocation3], 256
    $region17: #{_bert_intermediate_apply.1} parent=1 // pred_fallthru
      _
    // Predicated region
    $region18: #{_bert_intermediate_apply.1} parent=1 // pred_check
      _
    $region19: #{_bert_intermediate_apply.1} parent=1 // pred_check_branch
      %41 = sbr.rel (0) target = $region21
    $region20: #{_bert_intermediate_apply.1} parent=1 // pred_region
      %42 = dma.done [#allocation6], 8192
    $region21: #{_bert_intermediate_apply.1} parent=1 // pred_fallthru
      _
    %v43 = vld [vmem:[#allocation2] sm:$0xff]
    %v44 = vld [vmem:[#allocation2 + $0x8] sm:$0xff]
    %v45 = vld [vmem:[#allocation5] sm:$0xff]
    %v46 = vld [vmem:[#allocation5 + $0x8] sm:$0xff]
    %v47 = vld [vmem:[#allocation5 + $0x10] sm:$0xff]
    %v48 = vld [vmem:[#allocation5 + $0x18] sm:$0xff]
    %v49 = vld [vmem:[#allocation5 + $0x20] sm:$0xff]
    %v50 = vld [vmem:[#allocation5 + $0x28] sm:$0xff]
    %v51 = vld [vmem:[#allocation5 + $0x30] sm:$0xff]
    %v52 = vld [vmem:[#allocation5 + $0x38] sm:$0xff]
    %v53 = vld [vmem:[#allocation5 + $0x40] sm:$0xff]
    %v54 = vld [vmem:[#allocation5 + $0x48] sm:$0xff]
    %v55 = vld [vmem:[#allocation5 + $0x50] sm:$0xff]
    %v56 = vld [vmem:[#allocation5 + $0x58] sm:$0xff]
    %v57 = vld [vmem:[#allocation5 + $0x60] sm:$0xff]
    %v58 = vld [vmem:[#allocation5 + $0x68] sm:$0xff]
    %v59 = vld [vmem:[#allocation5 + $0x70] sm:$0xff]
    %v60 = vld [vmem:[#allocation5 + $0x78] sm:$0xff]
    %v61 = vld [vmem:[#allocation5 + $0x80] sm:$0xff]
    %v62 = vld [vmem:[#allocation5 + $0x88] sm:$0xff]
    %v63 = vld [vmem:[#allocation5 + $0x90] sm:$0xff]
    %v64 = vld [vmem:[#allocation5 + $0x98] sm:$0xff]
    %v65 = vld [vmem:[#allocation5 + $0xa0] sm:$0xff]
    %v66 = vld [vmem:[#allocation5 + $0xa8] sm:$0xff]
    %v67 = vld [vmem:[#allocation5 + $0xb0] sm:$0xff]
    %v68 = vld [vmem:[#allocation5 + $0xb8] sm:$0xff]
    %v69 = vld [vmem:[#allocation5 + $0xc0] sm:$0xff]
    %v70 = vld [vmem:[#allocation5 + $0xc8] sm:$0xff]
    %v71 = vld [vmem:[#allocation5 + $0xd0] sm:$0xff]
    %v72 = vld [vmem:[#allocation5 + $0xd8] sm:$0xff]
    %v73 = vld [vmem:[#allocation5 + $0xe0] sm:$0xff]
    %v74 = vld [vmem:[#allocation5 + $0xe8] sm:$0xff]
    %v75 = vld [vmem:[#allocation5 + $0xf0] sm:$0xff]
    %v76 = vld [vmem:[#allocation5 + $0xf8] sm:$0xff]
    %v77 = vld [vmem:[#allocation5 + $0x100] sm:$0xff]
    %v78 = vld [vmem:[#allocation5 + $0x108] sm:$0xff]
    %v79 = vld [vmem:[#allocation5 + $0x110] sm:$0xff]
    %v80 = vld [vmem:[#allocation5 + $0x118] sm:$0xff]
    %v81 = vld [vmem:[#allocation5 + $0x120] sm:$0xff]
    %v82 = vld [vmem:[#allocation5 + $0x128] sm:$0xff]
    %v83 = vld [vmem:[#allocation5 + $0x130] sm:$0xff]
    %v84 = vld [vmem:[#allocation5 + $0x138] sm:$0xff]
    %v85 = vld [vmem:[#allocation5 + $0x140] sm:$0xff]
    %v86 = vld [vmem:[#allocation5 + $0x148] sm:$0xff]
    %v87 = vld [vmem:[#allocation5 + $0x150] sm:$0xff]
    %v88 = vld [vmem:[#allocation5 + $0x158] sm:$0xff]
    %v89 = vld [vmem:[#allocation5 + $0x160] sm:$0xff]
    %v90 = vld [vmem:[#allocation5 + $0x168] sm:$0xff]
    %v91 = vld [vmem:[#allocation5 + $0x170] sm:$0xff]
    %v92 = vld [vmem:[#allocation5 + $0x178] sm:$0xff]
    %v93 = vld [vmem:[#allocation5 + $0x180] sm:$0xff]
    %v94 = vld [vmem:[#allocation5 + $0x188] sm:$0xff]
    %v95 = vld [vmem:[#allocation5 + $0x190] sm:$0xff]
    %v96 = vld [vmem:[#allocation5 + $0x198] sm:$0xff]
    %v97 = vld [vmem:[#allocation5 + $0x1a0] sm:$0xff]
    %v98 = vld [vmem:[#allocation5 + $0x1a8] sm:$0xff]
    %v99 = vld [vmem:[#allocation5 + $0x1b0] sm:$0xff]
    %v100 = vld [vmem:[#allocation5 + $0x1b8] sm:$0xff]
    %v101 = vld [vmem:[#allocation5 + $0x1c0] sm:$0xff]
    %v102 = vld [vmem:[#allocation5 + $0x1c8] sm:$0xff]
    %v103 = vld [vmem:[#allocation5 + $0x1d0] sm:$0xff]
    %v104 = vld [vmem:[#allocation5 + $0x1d8] sm:$0xff]
    %v105 = vld [vmem:[#allocation5 + $0x1e0] sm:$0xff]
    %v106 = vld [vmem:[#allocation5 + $0x1e8] sm:$0xff]
    %v107 = vld [vmem:[#allocation5 + $0x1f0] sm:$0xff]
    %v108 = vld [vmem:[#allocation5 + $0x1f8] sm:$0xff]
    %v109 = vld [vmem:[%s2] sm:$0xf]
    %v111 = vlaneseq
    %v112 = vshrl.u32 %v111, 7
    %v113 = vsub.s32 0, %v112
    %v114 = vrot.slane %v109, %v113
    %v115 = vlaneseq
    %v116 = vshrl.u32 %v115, 7
    %v117 = vsub.s32 1, %v116
    %v118 = vrot.slane %v109, %v117
    %v119 = vlaneseq
    %v120 = vshrl.u32 %v119, 7
    %v121 = vsub.s32 2, %v120
    %v122 = vrot.slane %v109, %v121
    %v123 = vlaneseq
    %v124 = vshrl.u32 %v123, 7
    %v125 = vsub.s32 3, %v124
    %v126 = vrot.slane %v109, %v125
    %131 = vmatprep.subr.mxu0 %v106
    %132 = vmatpush1.msra.mxu0 %v105
    %133 = vmatprep.subr.mxu0 %v102
    %134 = vmatpush1.msra.mxu0 %v101
    %135 = vmatprep.subr.mxu0 %v98
    %136 = vmatpush1.msra.mxu0 %v97
    %137 = vmatprep.subr.mxu0 %v94
    %138 = vmatpush1.msra.mxu0 %v93
    %139 = vmatprep.subr.mxu0 %v90
    %140 = vmatpush1.msra.mxu0 %v89
    %141 = vmatprep.subr.mxu0 %v86
    %142 = vmatpush1.msra.mxu0 %v85
    %143 = vmatprep.subr.mxu0 %v82
    %144 = vmatpush1.msra.mxu0 %v81
    %145 = vmatprep.subr.mxu0 %v78
    %146 = vmatpush1.msra.mxu0 %v77
    %147 = vmatprep.subr.mxu0 %v74
    %148 = vmatpush1.msra.mxu0 %v73
    %149 = vmatprep.subr.mxu0 %v70
    %150 = vmatpush1.msra.mxu0 %v69
    %151 = vmatprep.subr.mxu0 %v66
    %152 = vmatpush1.msra.mxu0 %v65
    %153 = vmatprep.subr.mxu0 %v62
    %154 = vmatpush1.msra.mxu0 %v61
    %155 = vmatprep.subr.mxu0 %v58
    %156 = vmatpush1.msra.mxu0 %v57
    %157 = vmatprep.subr.mxu0 %v54
    %158 = vmatpush1.msra.mxu0 %v53
    %159 = vmatprep.subr.mxu0 %v50
    %160 = vmatpush1.msra.mxu0 %v49
    %161 = vmatprep.subr.mxu0 %v46
    %162 = vmatpush1.msra.mxu0 %v45
    %163 = vmatprep.subr.mxu0 0.0
    %164 = vmatpush2.msra.mxu0 0.0
    %165 = vmatprep.subr.mxu0 0.0
    %166 = vmatpush2.msra.mxu0 0.0
    %167 = vmatprep.subr.mxu0 0.0
    %168 = vmatpush2.msra.mxu0 0.0
    %169 = vmatprep.subr.mxu0 0.0
    %170 = vmatpush2.msra.mxu0 0.0
    %171 = vmatprep.subr.mxu0 0.0
    %172 = vmatpush2.msra.mxu0 0.0
    %173 = vmatprep.subr.mxu0 0.0
    %174 = vmatpush2.msra.mxu0 0.0
    %175 = vmatprep.subr.mxu0 0.0
    %176 = vmatpush2.msra.mxu0 0.0
    %177 = vmatprep.subr.mxu0 0.0
    %178 = vmatpush2.msra.mxu0 0.0
    %179 = vmatprep.subr.mxu0 0.0
    %180 = vmatpush2.msra.mxu0 0.0
    %181 = vmatprep.subr.mxu0 0.0
    %182 = vmatpush2.msra.mxu0 0.0
    %183 = vmatprep.subr.mxu0 0.0
    %184 = vmatpush2.msra.mxu0 0.0
    %185 = vmatprep.subr.mxu0 0.0
    %186 = vmatpush2.msra.mxu0 0.0
    %187 = vmatprep.subr.mxu0 0.0
    %188 = vmatpush2.msra.mxu0 0.0
    %189 = vmatprep.subr.mxu0 0.0
    %190 = vmatpush2.msra.mxu0 0.0
    %191 = vmatprep.subr.mxu0 0.0
    %192 = vmatpush2.msra.mxu0 0.0
    %193 = vmatprep.subr.mxu0 0.0
    %194 = vmatpush2.msra.mxu0 0.0
    %195 = vmatprep.mubr.f32.mxu0 0.0
    %196 = vmatmul.mubr.f32.gmra.mxu0 %v43
    %v197 = vpop.f32.mrf.mxu0
    %v198 = vadd.f32 %v114, %v197
    %v199 = vpop.f32.mrf.mxu0
    %v200 = vadd.f32 %v118, %v199
    %201 = vmatprep.mubr.f32.mxu0 0.0
    %202 = vmatmul.mubr.f32.gmra.mxu0 %v44
    %v203 = vpop.f32.mrf.mxu0
    %v204 = vadd.f32 %v114, %v203
    %v205 = vpop.f32.mrf.mxu0
    %v206 = vadd.f32 %v118, %v205
    %207 = vdwg.mxu0
    %208 = vmatprep.subr.mxu0 %v108
    %209 = vmatpush1.msra.mxu0 %v107
    %210 = vmatprep.subr.mxu0 %v104
    %211 = vmatpush1.msra.mxu0 %v103
    %212 = vmatprep.subr.mxu0 %v100
    %213 = vmatpush1.msra.mxu0 %v99
    %214 = vmatprep.subr.mxu0 %v96
    %215 = vmatpush1.msra.mxu0 %v95
    %216 = vmatprep.subr.mxu0 %v92
    %217 = vmatpush1.msra.mxu0 %v91
    %218 = vmatprep.subr.mxu0 %v88
    %219 = vmatpush1.msra.mxu0 %v87
    %220 = vmatprep.subr.mxu0 %v84
    %221 = vmatpush1.msra.mxu0 %v83
    %222 = vmatprep.subr.mxu0 %v80
    %223 = vmatpush1.msra.mxu0 %v79
    %224 = vmatprep.subr.mxu0 %v76
    %225 = vmatpush1.msra.mxu0 %v75
    %226 = vmatprep.subr.mxu0 %v72
    %227 = vmatpush1.msra.mxu0 %v71
    %228 = vmatprep.subr.mxu0 %v68
    %229 = vmatpush1.msra.mxu0 %v67
    %230 = vmatprep.subr.mxu0 %v64
    %231 = vmatpush1.msra.mxu0 %v63
    %232 = vmatprep.subr.mxu0 %v60
    %233 = vmatpush1.msra.mxu0 %v59
    %234 = vmatprep.subr.mxu0 %v56
    %235 = vmatpush1.msra.mxu0 %v55
    %236 = vmatprep.subr.mxu0 %v52
    %237 = vmatpush1.msra.mxu0 %v51
    %238 = vmatprep.subr.mxu0 %v48
    %239 = vmatpush1.msra.mxu0 %v47
    %240 = vmatprep.subr.mxu0 0.0
    %241 = vmatpush2.msra.mxu0 0.0
    %242 = vmatprep.subr.mxu0 0.0
    %243 = vmatpush2.msra.mxu0 0.0
    %244 = vmatprep.subr.mxu0 0.0
    %245 = vmatpush2.msra.mxu0 0.0
    %246 = vmatprep.subr.mxu0 0.0
    %247 = vmatpush2.msra.mxu0 0.0
    %248 = vmatprep.subr.mxu0 0.0
    %249 = vmatpush2.msra.mxu0 0.0
    %250 = vmatprep.subr.mxu0 0.0
    %251 = vmatpush2.msra.mxu0 0.0
    %252 = vmatprep.subr.mxu0 0.0
    %253 = vmatpush2.msra.mxu0 0.0
    %254 = vmatprep.subr.mxu0 0.0
    %255 = vmatpush2.msra.mxu0 0.0
    %256 = vmatprep.subr.mxu0 0.0
    %257 = vmatpush2.msra.mxu0 0.0
    %258 = vmatprep.subr.mxu0 0.0
    %259 = vmatpush2.msra.mxu0 0.0
    %260 = vmatprep.subr.mxu0 0.0
    %261 = vmatpush2.msra.mxu0 0.0
    %262 = vmatprep.subr.mxu0 0.0
    %263 = vmatpush2.msra.mxu0 0.0
    %264 = vmatprep.subr.mxu0 0.0
    %265 = vmatpush2.msra.mxu0 0.0
    %266 = vmatprep.subr.mxu0 0.0
    %267 = vmatpush2.msra.mxu0 0.0
    %268 = vmatprep.subr.mxu0 0.0
    %269 = vmatpush2.msra.mxu0 0.0
    %270 = vmatprep.subr.mxu0 0.0
    %271 = vmatpush2.msra.mxu0 0.0
    %272 = vmatprep.mubr.f32.mxu0 0.0
    %273 = vmatmul.mubr.f32.gmra.mxu0 %v43
    %v274 = vpop.f32.mrf.mxu0
    %v275 = vadd.f32 %v122, %v274
    %v276 = vpop.f32.mrf.mxu0
    %v277 = vadd.f32 %v126, %v276
    %278 = vmatprep.mubr.f32.mxu0 0.0
    %279 = vmatmul.mubr.f32.gmra.mxu0 %v44
    %v280 = vpop.f32.mrf.mxu0
    %v281 = vadd.f32 %v122, %v280
    %v282 = vpop.f32.mrf.mxu0
    %v283 = vadd.f32 %v126, %v282
    %284 = vdwg.mxu0
    %v285 = vmul.f32 %v198, 0.5
    %v286 = vmul.f32 %v200, 0.5
    %v287 = vmul.f32 %v275, 0.5
    %v288 = vmul.f32 %v277, 0.5
    %v289 = vmul.f32 %v204, 0.5
    %v290 = vmul.f32 %v206, 0.5
    %v291 = vmul.f32 %v281, 0.5
    %v292 = vmul.f32 %v283, 0.5
    %v293 = vmul.f32 %v198, 0.70710856
    %v294 = vmul.f32 %v200, 0.70710856
    %v295 = vmul.f32 %v275, 0.70710856
    %v296 = vmul.f32 %v277, 0.70710856
    %v297 = vmul.f32 %v204, 0.70710856
    %v298 = vmul.f32 %v206, 0.70710856
    %v299 = vmul.f32 %v281, 0.70710856
    %v300 = vmul.f32 %v283, 0.70710856
    %v301 = verf.f32.pop %v293
    %v302 = verf.f32.pop %v294
    %v303 = verf.f32.pop %v295
    %v304 = verf.f32.pop %v296
    %v305 = verf.f32.pop %v297
    %v306 = verf.f32.pop %v298
    %v307 = verf.f32.pop %v299
    %v308 = verf.f32.pop %v300
    %v309 = vadd.f32 %v301, 1.0
    %v310 = vadd.f32 %v302, 1.0
    %v311 = vadd.f32 %v303, 1.0
    %v312 = vadd.f32 %v304, 1.0
    %v313 = vadd.f32 %v305, 1.0
    %v314 = vadd.f32 %v306, 1.0
    %v315 = vadd.f32 %v307, 1.0
    %v316 = vadd.f32 %v308, 1.0
    %v317 = vmul.f32 %v285, %v309
    %v318 = vmul.f32 %v286, %v310
    %v319 = vmul.f32 %v287, %v311
    %v320 = vmul.f32 %v288, %v312
    %v321 = vmul.f32 %v289, %v313
    %v322 = vmul.f32 %v290, %v314
    %v323 = vmul.f32 %v291, %v315
    %v324 = vmul.f32 %v292, %v316
    %325 = vst [vmem:[#allocation7] sm:$0xff] %v317
    %326 = vst [vmem:[#allocation7 + $0x8] sm:$0xff] %v318
    %327 = vst [vmem:[#allocation7 + $0x10] sm:$0xff] %v319
    %328 = vst [vmem:[#allocation7 + $0x18] sm:$0xff] %v320
    %329 = vst [vmem:[#allocation7 + $0x20] sm:$0xff] %v321
    %330 = vst [vmem:[#allocation7 + $0x28] sm:$0xff] %v322
    %331 = vst [vmem:[#allocation7 + $0x30] sm:$0xff] %v323
    %332 = vst [vmem:[#allocation7 + $0x38] sm:$0xff] %v324
    // Predicated region
    $region22: #{_bert_intermediate_apply.1} parent=1 // pred_check
      _
    $region23: #{_bert_intermediate_apply.1} parent=1 // pred_check_branch
      %334 = sbr.rel (0) target = $region25
    $region24: #{_bert_intermediate_apply.1} parent=1 // pred_region
      %s336 = ssub.s32 1024, 1024
      %337 = vsyncadd [#allocation4], %s336
      %s338 = sshll.u32 [#allocation7], 4
      %s339 = int_to_ptr.vmem [resolvable:$true] %s338
      %344 = dma.vmem_to_hbm [thread:$0]  %s339, 1024, %s3, [#allocation4], 512, 512, 32
    $region25: #{_bert_intermediate_apply.1} parent=1 // pred_fallthru
      _
    // Predicated region
    $region26: #{_bert_intermediate_apply.1} parent=1 // pred_check
      _
    $region27: #{_bert_intermediate_apply.1} parent=1 // pred_check_branch
      %346 = sbr.rel (0) target = $region29
    $region28: #{_bert_intermediate_apply.1} parent=1 // pred_region
      %347 = dma.done [#allocation4], 1024
    $region29: #{_bert_intermediate_apply.1} parent=1 // pred_fallthru
      _
    %348 = vsyncpa [#allocation3], 1
    %349 = vsyncpa [#allocation6], 1
    %350 = vsyncpa [#allocation4], 1

// kernel: _bert_intermediate_apply.1
$region0: #{_bert_intermediate_apply.1}
  #allocation0 [shape = 'u32[]', space=smem, size = 0x4, offset = 0x4, fixed_abs, tag = 'smem constant byte address 0x4 - core index']
  #allocation1 [shape = 'u32[144,128]{1,0:T(1,128)}', space=vmem, size = 0x12000, scoped, tag = 'internal scratch']
  %s0 = inlined_call_operand.hbm [shape: f32[16,128], index: 0, kind: input, shape index: {}]
  %s1 = inlined_call_operand.hbm [shape: f32[128,512], index: 1, kind: input, shape index: {}]
  %s2 = inlined_call_operand.vmem [shape: f32[1,512], index: 2, kind: input, shape index: {}]
  %s3 = inlined_call_operand.hbm [shape: f32[16,512], index: 3, kind: output, shape index: {}]
  %s4 = sld [smem:[#allocation0]]
  $region30: #{_bert_intermediate_apply.1} parent=0
    _
  %s6 = ssub.s32 1, %s4
  %s7 = scalar_select 0, %s6, %s4
  $region1: #{_bert_intermediate_apply.1} parent=0
    #allocation2 [shape = 'u8[8192]{0}', space=vmem, size = 0x2000, scoped, tag = 'input window, operand 0, single buffered']
    #allocation3 [shape = 's32[1]{0}', space=sflag, size = 0x4, scoped, tag = 'scoped memory for _bert_intermediate_apply.1']
    #allocation4 [shape = 's32[1]{0}', space=sflag, size = 0x4, scoped, tag = 'scoped memory for _bert_intermediate_apply.1']
    #allocation5 [shape = 'u8[262144]{0}', space=vmem, size = 0x40000, scoped, tag = 'input window, operand 1, single buffered']
    #allocation6 [shape = 's32[1]{0}', space=sflag, size = 0x4, scoped, tag = 'scoped memory for _bert_intermediate_apply.1']
    #allocation7 [shape = 'u8[32768]{0}', space=vmem, size = 0x8000, scoped, tag = 'output window, operand 0, single buffered']
    %8 = vsyncpa [#allocation3], 0
    %9 = vsyncpa [#allocation6], 0
    %10 = vsyncpa [#allocation4], 0
    // Predicated region
    $region2: #{_bert_intermediate_apply.1} parent=1 // pred_check
      _
    $region3: #{_bert_intermediate_apply.1} parent=1 // pred_check_branch
      %12 = sbr.rel (0) target = $region5
    $region4: #{_bert_intermediate_apply.1} parent=1 // pred_region
      %s14 = ssub.s32 256, 256
      %15 = vsyncadd [#allocation3], %s14
      %s16 = sshll.u32 [#allocation2], 4
      %s17 = int_to_ptr.vmem [resolvable:$true] %s16
      %22 = dma.hbm_to_vmem [thread:$0]  %s0, 256, %s17, [#allocation3], 128, 128, 8
    $region5: #{_bert_intermediate_apply.1} parent=1 // pred_fallthru
      _
    // Predicated region
    $region6: #{_bert_intermediate_apply.1} parent=1 // pred_check
      _
    $region7: #{_bert_intermediate_apply.1} parent=1 // pred_check_branch
      %24 = sbr.rel (0) target = $region9
    $region8: #{_bert_intermediate_apply.1} parent=1 // pred_region
      %s26 = ssub.s32 8192, 8192
      %27 = vsyncadd [#allocation6], %s26
      %s28 = sshll.u32 [#allocation5], 4
      %s29 = int_to_ptr.vmem [resolvable:$true] %s28
      %34 = dma.hbm_to_vmem [thread:$0]  %s1, 8192, %s29, [#allocation6], 512, 512, 32
    $region9: #{_bert_intermediate_apply.1} parent=1 // pred_fallthru
      _
    // Predicated region
    $region10: #{_bert_intermediate_apply.1} parent=1 // pred_check
      _
    $region11: #{_bert_intermediate_apply.1} parent=1 // pred_check_branch
      %36 = sbr.rel (0) target = $region13
    $region12: #{_bert_intermediate_apply.1} parent=1 // pred_region
      _
    $region13: #{_bert_intermediate_apply.1} parent=1 // pred_fallthru
      _
    // Predicated region
    $region14: #{_bert_intermediate_apply.1} parent=1 // pred_check
      _
    $region15: #{_bert_intermediate_apply.1} parent=1 // pred_check_branch
      %38 = sbr.rel (0) target = $region17
    $region16: #{_bert_intermediate_apply.1} parent=1 // pred_region
      %39 = dma.done [#allocation3], 256
    $region17: #{_bert_intermediate_apply.1} parent=1 // pred_fallthru
      _
    // Predicated region
    $region18: #{_bert_intermediate_apply.1} parent=1 // pred_check
      _
    $region19: #{_bert_intermediate_apply.1} parent=1 // pred_check_branch
      %41 = sbr.rel (0) target = $region21
    $region20: #{_bert_intermediate_apply.1} parent=1 // pred_region
      %42 = dma.done [#allocation6], 8192
    $region21: #{_bert_intermediate_apply.1} parent=1 // pred_fallthru
      _
    %v43 = vld [vmem:[#allocation2] sm:$0xff]
    %v44 = vld [vmem:[#allocation2 + $0x8] sm:$0xff]
    %v45 = vld [vmem:[#allocation5] sm:$0xff]
    %v46 = vld [vmem:[#allocation5 + $0x8] sm:$0xff]
    %v47 = vld [vmem:[#allocation5 + $0x10] sm:$0xff]
    %v48 = vld [vmem:[#allocation5 + $0x18] sm:$0xff]
    %v49 = vld [vmem:[#allocation5 + $0x20] sm:$0xff]
    %v50 = vld [vmem:[#allocation5 + $0x28] sm:$0xff]
    %v51 = vld [vmem:[#allocation5 + $0x30] sm:$0xff]
    %v52 = vld [vmem:[#allocation5 + $0x38] sm:$0xff]
    %v53 = vld [vmem:[#allocation5 + $0x40] sm:$0xff]
    %v54 = vld [vmem:[#allocation5 + $0x48] sm:$0xff]
    %v55 = vld [vmem:[#allocation5 + $0x50] sm:$0xff]
    %v56 = vld [vmem:[#allocation5 + $0x58] sm:$0xff]
    %v57 = vld [vmem:[#allocation5 + $0x60] sm:$0xff]
    %v58 = vld [vmem:[#allocation5 + $0x68] sm:$0xff]
    %v59 = vld [vmem:[#allocation5 + $0x70] sm:$0xff]
    %v60 = vld [vmem:[#allocation5 + $0x78] sm:$0xff]
    %v61 = vld [vmem:[#allocation5 + $0x80] sm:$0xff]
    %v62 = vld [vmem:[#allocation5 + $0x88] sm:$0xff]
    %v63 = vld [vmem:[#allocation5 + $0x90] sm:$0xff]
    %v64 = vld [vmem:[#allocation5 + $0x98] sm:$0xff]
    %v65 = vld [vmem:[#allocation5 + $0xa0] sm:$0xff]
    %v66 = vld [vmem:[#allocation5 + $0xa8] sm:$0xff]
    %v67 = vld [vmem:[#allocation5 + $0xb0] sm:$0xff]
    %v68 = vld [vmem:[#allocation5 + $0xb8] sm:$0xff]
    %v69 = vld [vmem:[#allocation5 + $0xc0] sm:$0xff]
    %v70 = vld [vmem:[#allocation5 + $0xc8] sm:$0xff]
    %v71 = vld [vmem:[#allocation5 + $0xd0] sm:$0xff]
    %v72 = vld [vmem:[#allocation5 + $0xd8] sm:$0xff]
    %v73 = vld [vmem:[#allocation5 + $0xe0] sm:$0xff]
    %v74 = vld [vmem:[#allocation5 + $0xe8] sm:$0xff]
    %v75 = vld [vmem:[#allocation5 + $0xf0] sm:$0xff]
    %v76 = vld [vmem:[#allocation5 + $0xf8] sm:$0xff]
    %v77 = vld [vmem:[#allocation5 + $0x100] sm:$0xff]
    %v78 = vld [vmem:[#allocation5 + $0x108] sm:$0xff]
    %v79 = vld [vmem:[#allocation5 + $0x110] sm:$0xff]
    %v80 = vld [vmem:[#allocation5 + $0x118] sm:$0xff]
    %v81 = vld [vmem:[#allocation5 + $0x120] sm:$0xff]
    %v82 = vld [vmem:[#allocation5 + $0x128] sm:$0xff]
    %v83 = vld [vmem:[#allocation5 + $0x130] sm:$0xff]
    %v84 = vld [vmem:[#allocation5 + $0x138] sm:$0xff]
    %v85 = vld [vmem:[#allocation5 + $0x140] sm:$0xff]
    %v86 = vld [vmem:[#allocation5 + $0x148] sm:$0xff]
    %v87 = vld [vmem:[#allocation5 + $0x150] sm:$0xff]
    %v88 = vld [vmem:[#allocation5 + $0x158] sm:$0xff]
    %v89 = vld [vmem:[#allocation5 + $0x160] sm:$0xff]
    %v90 = vld [vmem:[#allocation5 + $0x168] sm:$0xff]
    %v91 = vld [vmem:[#allocation5 + $0x170] sm:$0xff]
    %v92 = vld [vmem:[#allocation5 + $0x178] sm:$0xff]
    %v93 = vld [vmem:[#allocation5 + $0x180] sm:$0xff]
    %v94 = vld [vmem:[#allocation5 + $0x188] sm:$0xff]
    %v95 = vld [vmem:[#allocation5 + $0x190] sm:$0xff]
    %v96 = vld [vmem:[#allocation5 + $0x198] sm:$0xff]
    %v97 = vld [vmem:[#allocation5 + $0x1a0] sm:$0xff]
    %v98 = vld [vmem:[#allocation5 + $0x1a8] sm:$0xff]
    %v99 = vld [vmem:[#allocation5 + $0x1b0] sm:$0xff]
    %v100 = vld [vmem:[#allocation5 + $0x1b8] sm:$0xff]
    %v101 = vld [vmem:[#allocation5 + $0x1c0] sm:$0xff]
    %v102 = vld [vmem:[#allocation5 + $0x1c8] sm:$0xff]
    %v103 = vld [vmem:[#allocation5 + $0x1d0] sm:$0xff]
    %v104 = vld [vmem:[#allocation5 + $0x1d8] sm:$0xff]
    %v105 = vld [vmem:[#allocation5 + $0x1e0] sm:$0xff]
    %v106 = vld [vmem:[#allocation5 + $0x1e8] sm:$0xff]
    %v107 = vld [vmem:[#allocation5 + $0x1f0] sm:$0xff]
    %v108 = vld [vmem:[#allocation5 + $0x1f8] sm:$0xff]
    %v109 = vld [vmem:[%s2] sm:$0xf]
    %v111 = vlaneseq
    %v112 = vshrl.u32 %v111, 7
    %v113 = vsub.s32 0, %v112
    %v114 = vrot.slane %v109, %v113
    %v115 = vlaneseq
    %v116 = vshrl.u32 %v115, 7
    %v117 = vsub.s32 1, %v116
    %v118 = vrot.slane %v109, %v117
    %v119 = vlaneseq
    %v120 = vshrl.u32 %v119, 7
    %v121 = vsub.s32 2, %v120
    %v122 = vrot.slane %v109, %v121
    %v123 = vlaneseq
    %v124 = vshrl.u32 %v123, 7
    %v125 = vsub.s32 3, %v124
    %v126 = vrot.slane %v109, %v125
    %131 = vmatprep.subr.mxu0 %v106
    %132 = vmatpush1.msra.mxu0 %v105
    %133 = vmatprep.subr.mxu0 %v102
    %134 = vmatpush1.msra.mxu0 %v101
    %135 = vmatprep.subr.mxu0 %v98
    %136 = vmatpush1.msra.mxu0 %v97
    %137 = vmatprep.subr.mxu0 %v94
    %138 = vmatpush1.msra.mxu0 %v93
    %139 = vmatprep.subr.mxu0 %v90
    %140 = vmatpush1.msra.mxu0 %v89
    %141 = vmatprep.subr.mxu0 %v86
    %142 = vmatpush1.msra.mxu0 %v85
    %143 = vmatprep.subr.mxu0 %v82
    %144 = vmatpush1.msra.mxu0 %v81
    %145 = vmatprep.subr.mxu0 %v78
    %146 = vmatpush1.msra.mxu0 %v77
    %147 = vmatprep.subr.mxu0 %v74
    %148 = vmatpush1.msra.mxu0 %v73
    %149 = vmatprep.subr.mxu0 %v70
    %150 = vmatpush1.msra.mxu0 %v69
    %151 = vmatprep.subr.mxu0 %v66
    %152 = vmatpush1.msra.mxu0 %v65
    %153 = vmatprep.subr.mxu0 %v62
    %154 = vmatpush1.msra.mxu0 %v61
    %155 = vmatprep.subr.mxu0 %v58
    %156 = vmatpush1.msra.mxu0 %v57
    %157 = vmatprep.subr.mxu0 %v54
    %158 = vmatpush1.msra.mxu0 %v53
    %159 = vmatprep.subr.mxu0 %v50
    %160 = vmatpush1.msra.mxu0 %v49
    %161 = vmatprep.subr.mxu0 %v46
    %162 = vmatpush1.msra.mxu0 %v45
    %163 = vmatprep.subr.mxu0 0.0
    %164 = vmatpush2.msra.mxu0 0.0
    %165 = vmatprep.subr.mxu0 0.0
    %166 = vmatpush2.msra.mxu0 0.0
    %167 = vmatprep.subr.mxu0 0.0
    %168 = vmatpush2.msra.mxu0 0.0
    %169 = vmatprep.subr.mxu0 0.0
    %170 = vmatpush2.msra.mxu0 0.0
    %171 = vmatprep.subr.mxu0 0.0
    %172 = vmatpush2.msra.mxu0 0.0
    %173 = vmatprep.subr.mxu0 0.0
    %174 = vmatpush2.msra.mxu0 0.0
    %175 = vmatprep.subr.mxu0 0.0
    %176 = vmatpush2.msra.mxu0 0.0
    %177 = vmatprep.subr.mxu0 0.0
    %178 = vmatpush2.msra.mxu0 0.0
    %179 = vmatprep.subr.mxu0 0.0
    %180 = vmatpush2.msra.mxu0 0.0
    %181 = vmatprep.subr.mxu0 0.0
    %182 = vmatpush2.msra.mxu0 0.0
    %183 = vmatprep.subr.mxu0 0.0
    %184 = vmatpush2.msra.mxu0 0.0
    %185 = vmatprep.subr.mxu0 0.0
    %186 = vmatpush2.msra.mxu0 0.0
    %187 = vmatprep.subr.mxu0 0.0
    %188 = vmatpush2.msra.mxu0 0.0
    %189 = vmatprep.subr.mxu0 0.0
    %190 = vmatpush2.msra.mxu0 0.0
    %191 = vmatprep.subr.mxu0 0.0
    %192 = vmatpush2.msra.mxu0 0.0
    %193 = vmatprep.subr.mxu0 0.0
    %194 = vmatpush2.msra.mxu0 0.0
    %195 = vmatprep.mubr.f32.mxu0 0.0
    %196 = vmatmul.mubr.f32.gmra.mxu0 %v43
    %v197 = vpop.f32.mrf.mxu0
    %v198 = vadd.f32 %v114, %v197
    %v199 = vpop.f32.mrf.mxu0
    %v200 = vadd.f32 %v118, %v199
    %201 = vmatprep.mubr.f32.mxu0 0.0
    %202 = vmatmul.mubr.f32.gmra.mxu0 %v44
    %v203 = vpop.f32.mrf.mxu0
    %v204 = vadd.f32 %v114, %v203
    %v205 = vpop.f32.mrf.mxu0
    %v206 = vadd.f32 %v118, %v205
    %207 = vdwg.mxu0
    %208 = vmatprep.subr.mxu0 %v108
    %209 = vmatpush1.msra.mxu0 %v107
    %210 = vmatprep.subr.mxu0 %v104
    %211 = vmatpush1.msra.mxu0 %v103
    %212 = vmatprep.subr.mxu0 %v100
    %213 = vmatpush1.msra.mxu0 %v99
    %214 = vmatprep.subr.mxu0 %v96
    %215 = vmatpush1.msra.mxu0 %v95
    %216 = vmatprep.subr.mxu0 %v92
    %217 = vmatpush1.msra.mxu0 %v91
    %218 = vmatprep.subr.mxu0 %v88
    %219 = vmatpush1.msra.mxu0 %v87
    %220 = vmatprep.subr.mxu0 %v84
    %221 = vmatpush1.msra.mxu0 %v83
    %222 = vmatprep.subr.mxu0 %v80
    %223 = vmatpush1.msra.mxu0 %v79
    %224 = vmatprep.subr.mxu0 %v76
    %225 = vmatpush1.msra.mxu0 %v75
    %226 = vmatprep.subr.mxu0 %v72
    %227 = vmatpush1.msra.mxu0 %v71
    %228 = vmatprep.subr.mxu0 %v68
    %229 = vmatpush1.msra.mxu0 %v67
    %230 = vmatprep.subr.mxu0 %v64
    %231 = vmatpush1.msra.mxu0 %v63
    %232 = vmatprep.subr.mxu0 %v60
    %233 = vmatpush1.msra.mxu0 %v59
    %234 = vmatprep.subr.mxu0 %v56
    %235 = vmatpush1.msra.mxu0 %v55
    %236 = vmatprep.subr.mxu0 %v52
    %237 = vmatpush1.msra.mxu0 %v51
    %238 = vmatprep.subr.mxu0 %v48
    %239 = vmatpush1.msra.mxu0 %v47
    %240 = vmatprep.subr.mxu0 0.0
    %241 = vmatpush2.msra.mxu0 0.0
    %242 = vmatprep.subr.mxu0 0.0
    %243 = vmatpush2.msra.mxu0 0.0
    %244 = vmatprep.subr.mxu0 0.0
    %245 = vmatpush2.msra.mxu0 0.0
    %246 = vmatprep.subr.mxu0 0.0
    %247 = vmatpush2.msra.mxu0 0.0
    %248 = vmatprep.subr.mxu0 0.0
    %249 = vmatpush2.msra.mxu0 0.0
    %250 = vmatprep.subr.mxu0 0.0
    %251 = vmatpush2.msra.mxu0 0.0
    %252 = vmatprep.subr.mxu0 0.0
    %253 = vmatpush2.msra.mxu0 0.0
    %254 = vmatprep.subr.mxu0 0.0
    %255 = vmatpush2.msra.mxu0 0.0
    %256 = vmatprep.subr.mxu0 0.0
    %257 = vmatpush2.msra.mxu0 0.0
    %258 = vmatprep.subr.mxu0 0.0
    %259 = vmatpush2.msra.mxu0 0.0
    %260 = vmatprep.subr.mxu0 0.0
    %261 = vmatpush2.msra.mxu0 0.0
    %262 = vmatprep.subr.mxu0 0.0
    %263 = vmatpush2.msra.mxu0 0.0
    %264 = vmatprep.subr.mxu0 0.0
    %265 = vmatpush2.msra.mxu0 0.0
    %266 = vmatprep.subr.mxu0 0.0
    %267 = vmatpush2.msra.mxu0 0.0
    %268 = vmatprep.subr.mxu0 0.0
    %269 = vmatpush2.msra.mxu0 0.0
    %270 = vmatprep.subr.mxu0 0.0
    %271 = vmatpush2.msra.mxu0 0.0
    %272 = vmatprep.mubr.f32.mxu0 0.0
    %273 = vmatmul.mubr.f32.gmra.mxu0 %v43
    %v274 = vpop.f32.mrf.mxu0
    %v275 = vadd.f32 %v122, %v274
    %v276 = vpop.f32.mrf.mxu0
    %v277 = vadd.f32 %v126, %v276
    %278 = vmatprep.mubr.f32.mxu0 0.0
    %279 = vmatmul.mubr.f32.gmra.mxu0 %v44
    %v280 = vpop.f32.mrf.mxu0
    %v281 = vadd.f32 %v122, %v280
    %v282 = vpop.f32.mrf.mxu0
    %v283 = vadd.f32 %v126, %v282
    %284 = vdwg.mxu0
    %v285 = vmul.f32 %v198, 0.5
    %v286 = vmul.f32 %v200, 0.5
    %v287 = vmul.f32 %v275, 0.5
    %v288 = vmul.f32 %v277, 0.5
    %v289 = vmul.f32 %v204, 0.5
    %v290 = vmul.f32 %v206, 0.5
    %v291 = vmul.f32 %v281, 0.5
    %v292 = vmul.f32 %v283, 0.5
    %v293 = vmul.f32 %v198, 0.70710856
    %v294 = vmul.f32 %v200, 0.70710856
    %v295 = vmul.f32 %v275, 0.70710856
    %v296 = vmul.f32 %v277, 0.70710856
    %v297 = vmul.f32 %v204, 0.70710856
    %v298 = vmul.f32 %v206, 0.70710856
    %v299 = vmul.f32 %v281, 0.70710856
    %v300 = vmul.f32 %v283, 0.70710856
    %v301 = verf.f32.pop %v293
    %v302 = verf.f32.pop %v294
    %v303 = verf.f32.pop %v295
    %v304 = verf.f32.pop %v296
    %v305 = verf.f32.pop %v297
    %v306 = verf.f32.pop %v298
    %v307 = verf.f32.pop %v299
    %v308 = verf.f32.pop %v300
    %v309 = vadd.f32 %v301, 1.0
    %v310 = vadd.f32 %v302, 1.0
    %v311 = vadd.f32 %v303, 1.0
    %v312 = vadd.f32 %v304, 1.0
    %v313 = vadd.f32 %v305, 1.0
    %v314 = vadd.f32 %v306, 1.0
    %v315 = vadd.f32 %v307, 1.0
    %v316 = vadd.f32 %v308, 1.0
    %v317 = vmul.f32 %v285, %v309
    %v318 = vmul.f32 %v286, %v310
    %v319 = vmul.f32 %v287, %v311
    %v320 = vmul.f32 %v288, %v312
    %v321 = vmul.f32 %v289, %v313
    %v322 = vmul.f32 %v290, %v314
    %v323 = vmul.f32 %v291, %v315
    %v324 = vmul.f32 %v292, %v316
    %325 = vst [vmem:[#allocation7] sm:$0xff] %v317
    %326 = vst [vmem:[#allocation7 + $0x8] sm:$0xff] %v318
    %327 = vst [vmem:[#allocation7 + $0x10] sm:$0xff] %v319
    %328 = vst [vmem:[#allocation7 + $0x18] sm:$0xff] %v320
    %329 = vst [vmem:[#allocation7 + $0x20] sm:$0xff] %v321
    %330 = vst [vmem:[#allocation7 + $0x28] sm:$0xff] %v322
    %331 = vst [vmem:[#allocation7 + $0x30] sm:$0xff] %v323
    %332 = vst [vmem:[#allocation7 + $0x38] sm:$0xff] %v324
    // Predicated region
    $region22: #{_bert_intermediate_apply.1} parent=1 // pred_check
      _
    $region23: #{_bert_intermediate_apply.1} parent=1 // pred_check_branch
      %334 = sbr.rel (0) target = $region25
    $region24: #{_bert_intermediate_apply.1} parent=1 // pred_region
      %s336 = ssub.s32 1024, 1024
      %337 = vsyncadd [#allocation4], %s336
      %s338 = sshll.u32 [#allocation7], 4
      %s339 = int_to_ptr.vmem [resolvable:$true] %s338
      %344 = dma.vmem_to_hbm [thread:$0]  %s339, 1024, %s3, [#allocation4], 512, 512, 32
    $region25: #{_bert_intermediate_apply.1} parent=1 // pred_fallthru
      _
    // Predicated region
    $region26: #{_bert_intermediate_apply.1} parent=1 // pred_check
      _
    $region27: #{_bert_intermediate_apply.1} parent=1 // pred_check_branch
      %346 = sbr.rel (0) target = $region29
    $region28: #{_bert_intermediate_apply.1} parent=1 // pred_region
      %347 = dma.done [#allocation4], 1024
    $region29: #{_bert_intermediate_apply.1} parent=1 // pred_fallthru
      _
    %348 = vsyncpa [#allocation3], 1
    %349 = vsyncpa [#allocation6], 1
    %350 = vsyncpa [#allocation4], 1

</llo_original>
